<compile_context>
chip_gen: v5e
topology: v5e:2x2
jax: 0.10.0
libtpu: 0.0.40
codegen_flags: <defaults>
</compile_context>

<pallas_src>
import functools

import jax
import jax.numpy as jnp
import numpy as np
from jax.experimental import pallas as pl
from jax.experimental.pallas import tpu as pltpu


def _unet_block_kernel(xp_ref, w_ref, mask_ref, g_ref, beta_ref, o_ref,
                       sum_ref, sq_ref, *, wp, m_cols, count, eps):
    """Grid = (phase, image).  phase 0: accumulate BN stats; phase 1: normalize.

    xp_ref   : (1, Cin, Lp)   bf16  zero-padded, row-flattened image
    w_ref    : (9, Cout, Cin) bf16  tap-major conv weights
    mask_ref : (1, M)         f32   1.0 on valid output columns, 0.0 on padding
    g_ref    : (Cout, 1)      f32   BN gamma
    beta_ref : (Cout, 1)      f32   BN beta
    o_ref    : (1, Cout, M)   f32   lane-aligned per-image output slab
    sum_ref, sq_ref : (Cout, 1) f32 resident per-channel accumulators
    """
    phase = pl.program_id(0)
    img = pl.program_id(1)

    @pl.when((phase == 0) & (img == 0))
    def _init():
        sum_ref[...] = jnp.zeros_like(sum_ref)
        sq_ref[...] = jnp.zeros_like(sq_ref)

    # 3x3 conv as 9 accumulating bf16 MXU matmuls over in-kernel tap slices.
    # TODO(synk): at real channel counts fuse into one K=9*Cin contraction with
    # Cout tiled to >=128 MXU rows; K=Cin per tap is fine at this toy size.
    conv = None
    for t in range(9):
        dy, dx = t // 3, t % 3
        off = dy * wp + dx
        part = jnp.dot(w_ref[t], xp_ref[0, :, off:off + m_cols],
                       preferred_element_type=jnp.float32)
        conv = part if conv is None else conv + part

    @pl.when(phase == 0)
    def _accumulate_stats():
        masked = conv * mask_ref[...]                         # zero halo columns
        sum_ref[...] += jnp.sum(masked, axis=-1, keepdims=True)
        sq_ref[...] += jnp.sum(masked * conv, axis=-1, keepdims=True)

    @pl.when(phase == 1)
    def _normalize_store():
        inv_count = 1.0 / count
        mean = sum_ref[...] * inv_count                       # (Cout, 1)
        var = sq_ref[...] * inv_count - mean * mean           # biased (BN train)
        inv = jax.lax.rsqrt(var + eps)
        scale = inv * g_ref[...]                              # folded BN affine
        shift = beta_ref[...] - mean * scale
        o_ref[0] = jnp.maximum(conv * scale + shift, 0.0).astype(o_ref.dtype)


def unet_block_forward(x_nchw, w_oihw, bias, gamma, beta, *, eps=1e-5):
    """Pallas implementation of UnetBlock.forward.  Input/output are NCHW.

    `bias` is accepted for API parity but intentionally unused: a conv bias is
    mathematically a no-op before BatchNorm in training mode."""
    del bias
    N, Cin, H, W = x_nchw.shape
    Cout = w_oihw.shape[0]
    Wp = W + 2                                  # padded row width
    HWp = H * Wp                                # valid conv-slab columns
    M = ((HWp + 127) // 128) * 128              # lane-aligned slab width
    max_off = 2 * Wp + 2                        # largest tap offset (dy=dx=2)
    rows = max(-(-(max_off + M) // Wp), H + 2)  # padded rows so slices stay in-bounds
    Lp = rows * Wp

    # Single cheap pad + flatten of the input (~1x traffic); taps are built
    # in-kernel, so no 9x im2col patch tensor is materialized in HBM.
    xp = jnp.pad(x_nchw, ((0, 0), (0, 0), (1, rows - H - 1), (1, 1)))
    xp = xp.reshape(N, Cin, Lp).astype(jnp.bfloat16)

    # Tap-major weights: w_taps[dy*3+dx, o, c] = w[o, c, dy, dx]
    w_taps = jnp.transpose(w_oihw, (2, 3, 0, 1)).reshape(9, Cout, Cin)
    w_taps = w_taps.astype(jnp.bfloat16)

    # Valid-column mask for the stats (drops the 2 halo columns per row and the
    # lane-alignment padding at the end of the slab).
    cols = np.arange(M)
    mask = jnp.asarray(((cols < HWp) & ((cols % Wp) < W))
                       .astype(np.float32).reshape(1, M))

    g2 = gamma.reshape(Cout, 1).astype(jnp.float32)
    b2 = beta.reshape(Cout, 1).astype(jnp.float32)

    kernel = functools.partial(_unet_block_kernel, wp=Wp, m_cols=M,
                               count=float(N * H * W), eps=eps)

    out_flat = pl.pallas_call(
        kernel,
        out_shape=jax.ShapeDtypeStruct((N, Cout, M), jnp.float32),
        grid_spec=pltpu.PrefetchScalarGridSpec(
            num_scalar_prefetch=0,
            grid=(2, N),                       # (phase, image); image is fastest
            in_specs=[
                pl.BlockSpec((1, Cin, Lp), lambda p, n: (n, 0, 0)),
                pl.BlockSpec((9, Cout, Cin), lambda p, n: (0, 0, 0)),
                pl.BlockSpec((1, M), lambda p, n: (0, 0)),
                pl.BlockSpec((Cout, 1), lambda p, n: (0, 0)),
                pl.BlockSpec((Cout, 1), lambda p, n: (0, 0)),
            ],
            out_specs=pl.BlockSpec((1, Cout, M), lambda p, n: (n, 0, 0)),
            scratch_shapes=[pltpu.VMEM((Cout, 1), jnp.float32),
                            pltpu.VMEM((Cout, 1), jnp.float32)],
        ),
        compiler_params=pltpu.CompilerParams(
            # Both axes are sequential: BN statistics are a cross-image
            # reduction feeding the later normalize phase.
            # TODO(synk): on v7x, shard the image axis across the 2 TensorCores
            # with a cross-core partial-stats reduction once spatially tiled.
            dimension_semantics=("arbitrary", "arbitrary"),
            vmem_limit_bytes=32 * 1024 * 1024,
        ),
    )(xp, w_taps, mask, g2, b2)

    # Drop lane padding + per-row halo columns; already channel-major (NCHW).
    return out_flat[:, :, :HWp].reshape(N, Cout, H, Wp)[:, :, :, :W]


def _reference_forward(x_nchw, w_oihw, bias, gamma, beta, eps=1e-5):
    """Plain-JAX f32 reference matching Conv2d(bias) -> BatchNorm2d(train) -> ReLU."""
    x = jnp.transpose(x_nchw, (0, 2, 3, 1)).astype(jnp.float32)
    xp = jnp.pad(x, ((0, 0), (1, 1), (1, 1), (0, 0)))
    w = jnp.transpose(w_oihw, (2, 3, 1, 0)).astype(jnp.float32)    # (3,3,Cin,Cout)
    N, H, W, _ = x.shape
    Cout = w.shape[-1]
    conv = jnp.zeros((N, H, W, Cout), jnp.float32)
    for dy in range(3):
        for dx in range(3):
            conv += jnp.einsum('nhwc,co->nhwo',
                               xp[:, dy:dy + H, dx:dx + W, :], w[dy, dx])
    conv += bias.reshape(1, 1, 1, Cout)
    mean = conv.mean(axis=(0, 1, 2))
    var = conv.var(axis=(0, 1, 2))     # biased, like BN training mode
    xhat = (conv - mean) * jax.lax.rsqrt(var + eps)
    y = xhat * gamma.reshape(1, 1, 1, Cout) + beta.reshape(1, 1, 1, Cout)
    y = jnp.maximum(y, 0.0)
    return jnp.transpose(y, (0, 3, 1, 2))


if __name__ == "__main__":
    # Small shapes consistent with the module: batch=2, in_dims=4, out_dims=8, 16x16.
    N, Cin, Cout, H, W = 2, 4, 8, 16, 16

    key = jax.random.PRNGKey(0)
    kx, kw, kb = jax.random.split(key, 3)
    x = jax.random.normal(kx, (N, Cin, H, W), jnp.float32)
    w = jax.random.normal(kw, (Cout, Cin, 3, 3), jnp.float32) * 0.1
    b = jax.random.normal(kb, (Cout,), jnp.float32) * 0.1
    gamma = jnp.ones((Cout,), jnp.float32)   # BatchNorm2d default init
    beta = jnp.zeros((Cout,), jnp.float32)   # BatchNorm2d default init

    out = unet_block_forward(x, w, b, gamma, beta)
    out = jax.block_until_ready(out)

    ref = jax.block_until_ready(_reference_forward(x, w, b, gamma, beta))
    assert out.shape == (N, Cout, H, W), out.shape
    # bf16 MXU operands -> looser tolerance than the pure-f32 path.
    np.testing.assert_allclose(np.asarray(out), np.asarray(ref),
                               rtol=5e-2, atol=5e-2)
    print("KERNEL_OK")
</pallas_src>

<mosaic_0001>
module attributes {stable_mosaic.version = 11 : i64} {
  func.func @_unet_block_kernel(%arg0: i32, %arg1: i32, %arg2: memref<1x4x432xbf16, #tpu.memory_space<vmem>>, %arg3: memref<9x8x4xbf16, #tpu.memory_space<vmem>>, %arg4: memref<1x384xf32, #tpu.memory_space<vmem>>, %arg5: memref<8x1xf32, #tpu.memory_space<vmem>>, %arg6: memref<8x1xf32, #tpu.memory_space<vmem>>, %arg7: memref<1x8x384xf32, #tpu.memory_space<vmem>>, %arg8: memref<8x1xf32, #tpu.memory_space<vmem>>, %arg9: memref<8x1xf32, #tpu.memory_space<vmem>>) attributes {dimension_semantics = [#tpu.dimension_semantics<arbitrary>, #tpu.dimension_semantics<arbitrary>], iteration_bounds = array<i64: 2, 2>, scalar_prefetch = 0 : i64, scratch_operands = 2 : i64, tpu.core_type = #tpu.core_type<tc>, window_params = [{transform_indices = @transform_0, window_bounds = array<i64: 1, 4, 432>}, {pipeline_mode = #tpu.pipeline_mode<synchronous>, transform_indices = @transform_1, window_bounds = array<i64: 9, 8, 4>}, {pipeline_mode = #tpu.pipeline_mode<synchronous>, transform_indices = @transform_2, window_bounds = array<i64: 1, 384>}, {pipeline_mode = #tpu.pipeline_mode<synchronous>, transform_indices = @transform_3, window_bounds = array<i64: 8, 1>}, {pipeline_mode = #tpu.pipeline_mode<synchronous>, transform_indices = @transform_4, window_bounds = array<i64: 8, 1>}, {transform_indices = @transform_5, window_bounds = array<i64: 1, 8, 384>}]} {
    %c0_i32 = arith.constant 0 : i32
    %0 = arith.cmpi eq, %arg0, %c0_i32 : i32
    %c0_i32_0 = arith.constant 0 : i32
    %1 = arith.cmpi eq, %arg1, %c0_i32_0 : i32
    %2 = arith.andi %0, %1 : i1
    %3 = arith.extui %2 : i1 to i32
    %c0_i32_1 = arith.constant 0 : i32
    %4 = arith.cmpi ne, %3, %c0_i32_1 : i32
    scf.if %4 {
      %cst_52 = arith.constant 0.000000e+00 : f32
      %64 = vector.broadcast %cst_52 : f32 to vector<8x1xf32>
      %c0_53 = arith.constant 0 : index
      %c0_54 = arith.constant 0 : index
      %65 = vector.load %arg8[%c0_53, %c0_54] : memref<8x1xf32, #tpu.memory_space<vmem>>, vector<8x1xf32>
      tpu.vector_store %arg8[%c0_53, %c0_54], %64 {strides = array<i32>} : memref<8x1xf32, #tpu.memory_space<vmem>>, vector<8x1xf32>,
      %cst_55 = arith.constant 0.000000e+00 : f32
      %66 = vector.broadcast %cst_55 : f32 to vector<8x1xf32>
      %c0_56 = arith.constant 0 : index
      %c0_57 = arith.constant 0 : index
      %67 = vector.load %arg9[%c0_56, %c0_57] : memref<8x1xf32, #tpu.memory_space<vmem>>, vector<8x1xf32>
      tpu.vector_store %arg9[%c0_56, %c0_57], %66 {strides = array<i32>} : memref<8x1xf32, #tpu.memory_space<vmem>>, vector<8x1xf32>,
    } else {
    }
    %c0 = arith.constant 0 : index
    %c0_2 = arith.constant 0 : index
    %c0_3 = arith.constant 0 : index
    %5 = vector.load %arg3[%c0, %c0_2, %c0_3] : memref<9x8x4xbf16, #tpu.memory_space<vmem>>, vector<1x8x4xbf16>
    %6 = vector.shape_cast %5 : vector<1x8x4xbf16> to vector<8x4xbf16>
    %c0_4 = arith.constant 0 : index
    %c0_5 = arith.constant 0 : index
    %c0_6 = arith.constant 0 : index
    %7 = vector.load %arg2[%c0_4, %c0_5, %c0_6] : memref<1x4x432xbf16, #tpu.memory_space<vmem>>, vector<1x4x384xbf16>
    %8 = vector.shape_cast %7 : vector<1x4x384xbf16> to vector<4x384xbf16>
    %cst = arith.constant dense<0.000000e+00> : vector<8x384xf32>
    %9 = tpu.matmul %6, %8, %cst {dimension_numbers = #tpu.dot_dimension_numbers<[1], [0], [0], [1], [0, 0, 1, 1], [], []>} : vector<8x4xbf16>, vector<4x384xbf16>, vector<8x384xf32> -> vector<8x384xf32>
    %c1 = arith.constant 1 : index
    %c0_7 = arith.constant 0 : index
    %c0_8 = arith.constant 0 : index
    %10 = vector.load %arg3[%c1, %c0_7, %c0_8] : memref<9x8x4xbf16, #tpu.memory_space<vmem>>, vector<1x8x4xbf16>
    %11 = vector.shape_cast %10 : vector<1x8x4xbf16> to vector<8x4xbf16>
    %c0_9 = arith.constant 0 : index
    %c0_10 = arith.constant 0 : index
    %c1_11 = arith.constant 1 : index
    %12 = vector.load %arg2[%c0_9, %c0_10, %c1_11] : memref<1x4x432xbf16, #tpu.memory_space<vmem>>, vector<1x4x384xbf16>
    %13 = vector.shape_cast %12 : vector<1x4x384xbf16> to vector<4x384xbf16>
    %cst_12 = arith.constant dense<0.000000e+00> : vector<8x384xf32>
    %14 = tpu.matmul %11, %13, %cst_12 {dimension_numbers = #tpu.dot_dimension_numbers<[1], [0], [0], [1], [0, 0, 1, 1], [], []>} : vector<8x4xbf16>, vector<4x384xbf16>, vector<8x384xf32> -> vector<8x384xf32>
    %15 = arith.addf %9, %14 : vector<8x384xf32>
    %c2 = arith.constant 2 : index
    %c0_13 = arith.constant 0 : index
    %c0_14 = arith.constant 0 : index
    %16 = vector.load %arg3[%c2, %c0_13, %c0_14] : memref<9x8x4xbf16, #tpu.memory_space<vmem>>, vector<1x8x4xbf16>
    %17 = vector.shape_cast %16 : vector<1x8x4xbf16> to vector<8x4xbf16>
    %c0_15 = arith.constant 0 : index
    %c0_16 = arith.constant 0 : index
    %c2_17 = arith.constant 2 : index
    %18 = vector.load %arg2[%c0_15, %c0_16, %c2_17] : memref<1x4x432xbf16, #tpu.memory_space<vmem>>, vector<1x4x384xbf16>
    %19 = vector.shape_cast %18 : vector<1x4x384xbf16> to vector<4x384xbf16>
    %cst_18 = arith.constant dense<0.000000e+00> : vector<8x384xf32>
    %20 = tpu.matmul %17, %19, %cst_18 {dimension_numbers = #tpu.dot_dimension_numbers<[1], [0], [0], [1], [0, 0, 1, 1], [], []>} : vector<8x4xbf16>, vector<4x384xbf16>, vector<8x384xf32> -> vector<8x384xf32>
    %21 = arith.addf %15, %20 : vector<8x384xf32>
    %c3 = arith.constant 3 : index
    %c0_19 = arith.constant 0 : index
    %c0_20 = arith.constant 0 : index
    %22 = vector.load %arg3[%c3, %c0_19, %c0_20] : memref<9x8x4xbf16, #tpu.memory_space<vmem>>, vector<1x8x4xbf16>
    %23 = vector.shape_cast %22 : vector<1x8x4xbf16> to vector<8x4xbf16>
    %c0_21 = arith.constant 0 : index
    %c0_22 = arith.constant 0 : index
    %c18 = arith.constant 18 : index
    %24 = vector.load %arg2[%c0_21, %c0_22, %c18] : memref<1x4x432xbf16, #tpu.memory_space<vmem>>, vector<1x4x384xbf16>
    %25 = vector.shape_cast %24 : vector<1x4x384xbf16> to vector<4x384xbf16>
    %cst_23 = arith.constant dense<0.000000e+00> : vector<8x384xf32>
    %26 = tpu.matmul %23, %25, %cst_23 {dimension_numbers = #tpu.dot_dimension_numbers<[1], [0], [0], [1], [0, 0, 1, 1], [], []>} : vector<8x4xbf16>, vector<4x384xbf16>, vector<8x384xf32> -> vector<8x384xf32>
    %27 = arith.addf %21, %26 : vector<8x384xf32>
    %c4 = arith.constant 4 : index
    %c0_24 = arith.constant 0 : index
    %c0_25 = arith.constant 0 : index
    %28 = vector.load %arg3[%c4, %c0_24, %c0_25] : memref<9x8x4xbf16, #tpu.memory_space<vmem>>, vector<1x8x4xbf16>
    %29 = vector.shape_cast %28 : vector<1x8x4xbf16> to vector<8x4xbf16>
    %c0_26 = arith.constant 0 : index
    %c0_27 = arith.constant 0 : index
    %c19 = arith.constant 19 : index
    %30 = vector.load %arg2[%c0_26, %c0_27, %c19] : memref<1x4x432xbf16, #tpu.memory_space<vmem>>, vector<1x4x384xbf16>
    %31 = vector.shape_cast %30 : vector<1x4x384xbf16> to vector<4x384xbf16>
    %cst_28 = arith.constant dense<0.000000e+00> : vector<8x384xf32>
    %32 = tpu.matmul %29, %31, %cst_28 {dimension_numbers = #tpu.dot_dimension_numbers<[1], [0], [0], [1], [0, 0, 1, 1], [], []>} : vector<8x4xbf16>, vector<4x384xbf16>, vector<8x384xf32> -> vector<8x384xf32>
    %33 = arith.addf %27, %32 : vector<8x384xf32>
    %c5 = arith.constant 5 : index
    %c0_29 = arith.constant 0 : index
    %c0_30 = arith.constant 0 : index
    %34 = vector.load %arg3[%c5, %c0_29, %c0_30] : memref<9x8x4xbf16, #tpu.memory_space<vmem>>, vector<1x8x4xbf16>
    %35 = vector.shape_cast %34 : vector<1x8x4xbf16> to vector<8x4xbf16>
    %c0_31 = arith.constant 0 : index
    %c0_32 = arith.constant 0 : index
    %c20 = arith.constant 20 : index
    %36 = vector.load %arg2[%c0_31, %c0_32, %c20] : memref<1x4x432xbf16, #tpu.memory_space<vmem>>, vector<1x4x384xbf16>
    %37 = vector.shape_cast %36 : vector<1x4x384xbf16> to vector<4x384xbf16>
    %cst_33 = arith.constant dense<0.000000e+00> : vector<8x384xf32>
    %38 = tpu.matmul %35, %37, %cst_33 {dimension_numbers = #tpu.dot_dimension_numbers<[1], [0], [0], [1], [0, 0, 1, 1], [], []>} : vector<8x4xbf16>, vector<4x384xbf16>, vector<8x384xf32> -> vector<8x384xf32>
    %39 = arith.addf %33, %38 : vector<8x384xf32>
    %c6 = arith.constant 6 : index
    %c0_34 = arith.constant 0 : index
    %c0_35 = arith.constant 0 : index
    %40 = vector.load %arg3[%c6, %c0_34, %c0_35] : memref<9x8x4xbf16, #tpu.memory_space<vmem>>, vector<1x8x4xbf16>
    %41 = vector.shape_cast %40 : vector<1x8x4xbf16> to vector<8x4xbf16>
    %c0_36 = arith.constant 0 : index
    %c0_37 = arith.constant 0 : index
    %c36 = arith.constant 36 : index
    %42 = vector.load %arg2[%c0_36, %c0_37, %c36] : memref<1x4x432xbf16, #tpu.memory_space<vmem>>, vector<1x4x384xbf16>
    %43 = vector.shape_cast %42 : vector<1x4x384xbf16> to vector<4x384xbf16>
    %cst_38 = arith.constant dense<0.000000e+00> : vector<8x384xf32>
    %44 = tpu.matmul %41, %43, %cst_38 {dimension_numbers = #tpu.dot_dimension_numbers<[1], [0], [0], [1], [0, 0, 1, 1], [], []>} : vector<8x4xbf16>, vector<4x384xbf16>, vector<8x384xf32> -> vector<8x384xf32>
    %45 = arith.addf %39, %44 : vector<8x384xf32>
    %c7 = arith.constant 7 : index
    %c0_39 = arith.constant 0 : index
    %c0_40 = arith.constant 0 : index
    %46 = vector.load %arg3[%c7, %c0_39, %c0_40] : memref<9x8x4xbf16, #tpu.memory_space<vmem>>, vector<1x8x4xbf16>
    %47 = vector.shape_cast %46 : vector<1x8x4xbf16> to vector<8x4xbf16>
    %c0_41 = arith.constant 0 : index
    %c0_42 = arith.constant 0 : index
    %c37 = arith.constant 37 : index
    %48 = vector.load %arg2[%c0_41, %c0_42, %c37] : memref<1x4x432xbf16, #tpu.memory_space<vmem>>, vector<1x4x384xbf16>
    %49 = vector.shape_cast %48 : vector<1x4x384xbf16> to vector<4x384xbf16>
    %cst_43 = arith.constant dense<0.000000e+00> : vector<8x384xf32>
    %50 = tpu.matmul %47, %49, %cst_43 {dimension_numbers = #tpu.dot_dimension_numbers<[1], [0], [0], [1], [0, 0, 1, 1], [], []>} : vector<8x4xbf16>, vector<4x384xbf16>, vector<8x384xf32> -> vector<8x384xf32>
    %51 = arith.addf %45, %50 : vector<8x384xf32>
    %c8 = arith.constant 8 : index
    %c0_44 = arith.constant 0 : index
    %c0_45 = arith.constant 0 : index
    %52 = vector.load %arg3[%c8, %c0_44, %c0_45] : memref<9x8x4xbf16, #tpu.memory_space<vmem>>, vector<1x8x4xbf16>
    %53 = vector.shape_cast %52 : vector<1x8x4xbf16> to vector<8x4xbf16>
    %c0_46 = arith.constant 0 : index
    %c0_47 = arith.constant 0 : index
    %c38 = arith.constant 38 : index
    %54 = vector.load %arg2[%c0_46, %c0_47, %c38] : memref<1x4x432xbf16, #tpu.memory_space<vmem>>, vector<1x4x384xbf16>
    %55 = vector.shape_cast %54 : vector<1x4x384xbf16> to vector<4x384xbf16>
    %cst_48 = arith.constant dense<0.000000e+00> : vector<8x384xf32>
    %56 = tpu.matmul %53, %55, %cst_48 {dimension_numbers = #tpu.dot_dimension_numbers<[1], [0], [0], [1], [0, 0, 1, 1], [], []>} : vector<8x4xbf16>, vector<4x384xbf16>, vector<8x384xf32> -> vector<8x384xf32>
    %57 = arith.addf %51, %56 : vector<8x384xf32>
    %c0_i32_49 = arith.constant 0 : i32
    %58 = arith.cmpi eq, %arg0, %c0_i32_49 : i32
    %59 = arith.extui %58 : i1 to i32
    %c0_i32_50 = arith.constant 0 : i32
    %60 = arith.cmpi ne, %59, %c0_i32_50 : i32
    scf.if %60 {
      %c0_52 = arith.constant 0 : index
      %c0_53 = arith.constant 0 : index
      %64 = vector.load %arg4[%c0_52, %c0_53] : memref<1x384xf32, #tpu.memory_space<vmem>>, vector<1x384xf32>
      %65 = vector.broadcast %64 : vector<1x384xf32> to vector<8x384xf32>
      %66 = arith.mulf %57, %65 : vector<8x384xf32>
      %c0_54 = arith.constant 0 : index
      %c0_55 = arith.constant 0 : index
      %67 = vector.load %arg8[%c0_54, %c0_55] : memref<8x1xf32, #tpu.memory_space<vmem>>, vector<8x1xf32>
      %cst_56 = arith.constant dense<0.000000e+00> : vector<8xf32>
      %68 = vector.multi_reduction <add>, %66, %cst_56 [1] : vector<8x384xf32> to vector<8xf32>
      %69 = vector.shape_cast %68 : vector<8xf32> to vector<8x1xf32>
      %70 = arith.addf %67, %69 : vector<8x1xf32>
      %c0_57 = arith.constant 0 : index
      %c0_58 = arith.constant 0 : index
      %71 = vector.load %arg8[%c0_57, %c0_58] : memref<8x1xf32, #tpu.memory_space<vmem>>, vector<8x1xf32>
      tpu.vector_store %arg8[%c0_57, %c0_58], %70 {strides = array<i32>} : memref<8x1xf32, #tpu.memory_space<vmem>>, vector<8x1xf32>,
      %c0_59 = arith.constant 0 : index
      %c0_60 = arith.constant 0 : index
      %72 = vector.load %arg9[%c0_59, %c0_60] : memref<8x1xf32, #tpu.memory_space<vmem>>, vector<8x1xf32>
      %73 = arith.mulf %66, %57 : vector<8x384xf32>
      %cst_61 = arith.constant dense<0.000000e+00> : vector<8xf32>
      %74 = vector.multi_reduction <add>, %73, %cst_61 [1] : vector<8x384xf32> to vector<8xf32>
      %75 = vector.shape_cast %74 : vector<8xf32> to vector<8x1xf32>
      %76 = arith.addf %72, %75 : vector<8x1xf32>
      %c0_62 = arith.constant 0 : index
      %c0_63 = arith.constant 0 : index
      %77 = vector.load %arg9[%c0_62, %c0_63] : memref<8x1xf32, #tpu.memory_space<vmem>>, vector<8x1xf32>
      tpu.vector_store %arg9[%c0_62, %c0_63], %76 {strides = array<i32>} : memref<8x1xf32, #tpu.memory_space<vmem>>, vector<8x1xf32>,
    } else {
    }
    %c1_i32 = arith.constant 1 : i32
    %61 = arith.cmpi eq, %arg0, %c1_i32 : i32
    %62 = arith.extui %61 : i1 to i32
    %c0_i32_51 = arith.constant 0 : i32
    %63 = arith.cmpi ne, %62, %c0_i32_51 : i32
    scf.if %63 {
      %c0_52 = arith.constant 0 : index
      %c0_53 = arith.constant 0 : index
      %64 = vector.load %arg8[%c0_52, %c0_53] : memref<8x1xf32, #tpu.memory_space<vmem>>, vector<8x1xf32>
      %cst_54 = arith.constant 0.001953125 : f32
      %65 = vector.broadcast %cst_54 : f32 to vector<8x1xf32>
      %66 = arith.mulf %64, %65 : vector<8x1xf32>
      %c0_55 = arith.constant 0 : index
      %c0_56 = arith.constant 0 : index
      %67 = vector.load %arg9[%c0_55, %c0_56] : memref<8x1xf32, #tpu.memory_space<vmem>>, vector<8x1xf32>
      %cst_57 = arith.constant 0.001953125 : f32
      %68 = vector.broadcast %cst_57 : f32 to vector<8x1xf32>
      %69 = arith.mulf %67, %68 : vector<8x1xf32>
      %70 = arith.mulf %66, %66 : vector<8x1xf32>
      %71 = arith.subf %69, %70 : vector<8x1xf32>
      %cst_58 = arith.constant 9.99999974E-6 : f32
      %72 = vector.broadcast %cst_58 : f32 to vector<8x1xf32>
      %73 = arith.addf %71, %72 : vector<8x1xf32>
      %74 = math.rsqrt %73 : vector<8x1xf32>
      %c0_59 = arith.constant 0 : index
      %c0_60 = arith.constant 0 : index
      %75 = vector.load %arg5[%c0_59, %c0_60] : memref<8x1xf32, #tpu.memory_space<vmem>>, vector<8x1xf32>
      %76 = arith.mulf %74, %75 : vector<8x1xf32>
      %c0_61 = arith.constant 0 : index
      %c0_62 = arith.constant 0 : index
      %77 = vector.load %arg6[%c0_61, %c0_62] : memref<8x1xf32, #tpu.memory_space<vmem>>, vector<8x1xf32>
      %78 = arith.mulf %66, %76 : vector<8x1xf32>
      %79 = arith.subf %77, %78 : vector<8x1xf32>
      %80 = vector.broadcast %76 : vector<8x1xf32> to vector<8x384xf32>
      %81 = arith.mulf %57, %80 : vector<8x384xf32>
      %82 = vector.broadcast %79 : vector<8x1xf32> to vector<8x384xf32>
      %83 = arith.addf %81, %82 : vector<8x384xf32>
      %cst_63 = arith.constant 0.000000e+00 : f32
      %84 = vector.broadcast %cst_63 : f32 to vector<8x384xf32>
      %85 = arith.maximumf %83, %84 : vector<8x384xf32>
      %c0_64 = arith.constant 0 : index
      %c0_65 = arith.constant 0 : index
      %c0_66 = arith.constant 0 : index
      %86 = vector.load %arg7[%c0_64, %c0_65, %c0_66] : memref<1x8x384xf32, #tpu.memory_space<vmem>>, vector<1x8x384xf32>
      %87 = vector.shape_cast %86 : vector<1x8x384xf32> to vector<8x384xf32>
      %88 = vector.shape_cast %85 : vector<8x384xf32> to vector<1x8x384xf32>
      tpu.vector_store %arg7[%c0_64, %c0_65, %c0_66], %88 {strides = array<i32>} : memref<1x8x384xf32, #tpu.memory_space<vmem>>, vector<1x8x384xf32>,
    } else {
    }
    return
  }
  func.func @transform_0(%arg0: i32, %arg1: i32) -> (i32, i32, i32) {
    %c0_i32 = arith.constant 0 : i32
    %c0_i32_0 = arith.constant 0 : i32
    %c0_i32_1 = arith.constant 0 : i32
    return %arg1, %c0_i32, %c0_i32_0 : i32, i32, i32
  }
  func.func @transform_1(%arg0: i32, %arg1: i32) -> (i32, i32, i32) {
    %c0_i32 = arith.constant 0 : i32
    %c0_i32_0 = arith.constant 0 : i32
    %c0_i32_1 = arith.constant 0 : i32
    %c0_i32_2 = arith.constant 0 : i32
    return %c0_i32, %c0_i32_0, %c0_i32_1 : i32, i32, i32
  }
  func.func @transform_2(%arg0: i32, %arg1: i32) -> (i32, i32) {
    %c0_i32 = arith.constant 0 : i32
    %c0_i32_0 = arith.constant 0 : i32
    %c0_i32_1 = arith.constant 0 : i32
    return %c0_i32, %c0_i32_0 : i32, i32
  }
  func.func @transform_3(%arg0: i32, %arg1: i32) -> (i32, i32) {
    %c0_i32 = arith.constant 0 : i32
    %c0_i32_0 = arith.constant 0 : i32
    %c0_i32_1 = arith.constant 0 : i32
    return %c0_i32, %c0_i32_0 : i32, i32
  }
  func.func @transform_4(%arg0: i32, %arg1: i32) -> (i32, i32) {
    %c0_i32 = arith.constant 0 : i32
    %c0_i32_0 = arith.constant 0 : i32
    %c0_i32_1 = arith.constant 0 : i32
    return %c0_i32, %c0_i32_0 : i32, i32
  }
  func.func @transform_5(%arg0: i32, %arg1: i32) -> (i32, i32, i32) {
    %c0_i32 = arith.constant 0 : i32
    %c0_i32_0 = arith.constant 0 : i32
    %c0_i32_1 = arith.constant 0 : i32
    return %arg1, %c0_i32, %c0_i32_0 : i32, i32, i32
  }
}

</mosaic_0001>

<llo_original>
// kernel: tpu_custom_call.1
$region0: #{tpu_custom_call.1}
  #allocation0 [shape = 'u32[]', space=smem, size = 0x4, offset = 0x4, fixed_abs, tag = 'smem constant byte address 0x4 - core index']
  #allocation1 [shape = 'u32[72,128]{1,0:T(1,128)}', space=vmem, size = 0x9000, scoped, tag = 'internal scratch']
  #allocation2 [shape = 'f32[8,1]{1,0:T(8,128)}', space=vmem, size = 0x1000, scoped, tag = 'scratch operand']
  #allocation3 [shape = 'f32[8,1]{1,0:T(8,128)}', space=vmem, size = 0x1000, scoped, tag = 'scratch operand']
  %s0 = inlined_call_operand.vmem [shape: bf16[2,4,432], index: 0, kind: input, shape index: {}]
  %s1 = inlined_call_operand.vmem [shape: bf16[9,8,4], index: 1, kind: input, shape index: {}]
  %s2 = inlined_call_operand.vmem [shape: f32[1,384], index: 2, kind: input, shape index: {}]
  %s3 = inlined_call_operand.vmem [shape: f32[8,1], index: 3, kind: input, shape index: {}]
  %s4 = inlined_call_operand.vmem [shape: f32[8,1], index: 4, kind: input, shape index: {}]
  %s5 = inlined_call_operand.hbm [shape: f32[2,8,384], index: 5, kind: output, shape index: {}]
  %s6 = sld [smem:[#allocation0]]
  $region65: #{tpu_custom_call.1} parent=0
    _
  %s8 = ssub.s32 1, %s6
  %s9 = scalar_select 0, %s8, %s6
  $region1: #{tpu_custom_call.1} parent=0
    #allocation4 [shape = 'u8[24576]{0}', space=vmem, size = 0x6000, scoped, tag = 'output window, operand 0']
    #allocation5 [shape = 's32[2]{0}', space=sflag, size = 0x8, scoped, tag = 'scoped memory for tpu_custom_call.1']
    %10 = vsyncpa [#allocation5], 0
    %s11 = scalar_lea.sflag [#allocation5], 1
    %12 = vsyncpa %s11, 0
    loop: start=0, step=1, limit=6
    $region2: #{tpu_custom_call.1} parent=1 // loop_pre_header
      _
    $region3: #{tpu_custom_call.1} parent=1 // loop_header
      %s14 = sphi 0, %s18
      %p15 = scmp.ge.s32.totalorder %s14, 6
      %s21 = sphi 0, %s33
      %s22 = sphi 0, %s29
      %s23 = sphi 0, %s21
      %s24 = sphi 0, %s22
      %s25 = sphi 0, %s23
      %s26 = sphi 0, %s24
      %s36 = sphi 0, %s38
      %s39 = sphi 0, %s36
      %s40 = sphi 0, %s39
      %s56 = sphi 0, %s40
      %s60 = sphi 0, %s60
      %s62 = sphi 0, %s60
      %s63 = sphi 0, %s62
      %s77 = sphi 0, %s63
      %s81 = sphi 0, %s81
      %s83 = sphi 0, %s81
      %s84 = sphi 0, %s83
      %s98 = sphi 0, %s84
      %s102 = sphi 0, %s102
      %s104 = sphi 0, %s102
      %s105 = sphi 0, %s104
      %s119 = sphi 0, %s105
      %s123 = sphi 0, %s123
      %s125 = sphi 0, %s123
      %s126 = sphi 0, %s125
      %s140 = sphi 0, %s126
      %s146 = sphi 0, %s148
      %s149 = sphi 0, %s146
      %s150 = sphi 0, %s149
      %s166 = sphi 0, %s150
    $region4: #{tpu_custom_call.1} parent=1 // loop_header_branch
      %17 = sbr.rel (%p15) target = $region8
    $region5: #{tpu_custom_call.1} parent=1 // loop_body
      %s19 = ssub.s32 %s14, 1
      %s20 = ssub.s32 %s14, 2
      %s27 = sadd.s32 1, %s22
      %p28 = scmp.ge.s32.totalorder %s27, 2
      %s29 = scalar_select %p28, 0, %s27
      %s30 = sadd.s32 1, %s21
      %s31 = scalar_select %p28, %s30, %s21
      %p32 = scmp.ge.s32.totalorder %s31, 2
      %s33 = scalar_select %p32, 0, %s31
      %s34 = ssub.s32 %s22, %s29
      %p35 = scmp.eq.s32.totalorder %s34, 0
      %s37 = sadd.s32 %s36, 1
      %s38 = scalar_select %p35, %s36, %s37
      %p41 = pneg %p35
      %p42 = scmp.eq.s32.totalorder %s14, 3
      %p43 = por %p41, %p42
      %p44 = scmp.ne.s32.totalorder %s36, %s39
      %p45 = scmp.eq.s32.totalorder %s14, 0
      %p46 = por %p44, %p45
      %p47 = scmp.ne.s32.totalorder %s36, %s39
      %p48 = scmp.eq.s32.totalorder %s19, 3
      %p49 = por %p47, %p48
      %p50 = scmp.ne.s32.totalorder %s39, %s40
      %p51 = scmp.eq.s32.totalorder %s19, 0
      %p52 = por %p50, %p51
      %p53 = scmp.ne.s32.totalorder %s39, %s40
      %p54 = scmp.eq.s32.totalorder %s20, 3
      %p55 = por %p53, %p54
      %p57 = scmp.ne.s32.totalorder %s40, %s56
      %p58 = scmp.eq.s32.totalorder %s20, 0
      %p59 = por %p57, %p58
      %s61 = sadd.s32 %s60, 1
      %p64 = scmp.eq.s32.totalorder %s14, 3
      %p65 = scmp.ne.s32.totalorder %s60, %s62
      %p66 = scmp.eq.s32.totalorder %s14, 0
      %p67 = por %p65, %p66
      %p68 = scmp.ne.s32.totalorder %s60, %s62
      %p69 = scmp.eq.s32.totalorder %s19, 3
      %p70 = por %p68, %p69
      %p71 = scmp.ne.s32.totalorder %s62, %s63
      %p72 = scmp.eq.s32.totalorder %s19, 0
      %p73 = por %p71, %p72
      %p74 = scmp.ne.s32.totalorder %s62, %s63
      %p75 = scmp.eq.s32.totalorder %s20, 3
      %p76 = por %p74, %p75
      %p78 = scmp.ne.s32.totalorder %s63, %s77
      %p79 = scmp.eq.s32.totalorder %s20, 0
      %p80 = por %p78, %p79
      %s82 = sadd.s32 %s81, 1
      %p85 = scmp.eq.s32.totalorder %s14, 3
      %p86 = scmp.ne.s32.totalorder %s81, %s83
      %p87 = scmp.eq.s32.totalorder %s14, 0
      %p88 = por %p86, %p87
      %p89 = scmp.ne.s32.totalorder %s81, %s83
      %p90 = scmp.eq.s32.totalorder %s19, 3
      %p91 = por %p89, %p90
      %p92 = scmp.ne.s32.totalorder %s83, %s84
      %p93 = scmp.eq.s32.totalorder %s19, 0
      %p94 = por %p92, %p93
      %p95 = scmp.ne.s32.totalorder %s83, %s84
      %p96 = scmp.eq.s32.totalorder %s20, 3
      %p97 = por %p95, %p96
      %p99 = scmp.ne.s32.totalorder %s84, %s98
      %p100 = scmp.eq.s32.totalorder %s20, 0
      %p101 = por %p99, %p100
      %s103 = sadd.s32 %s102, 1
      %p106 = scmp.eq.s32.totalorder %s14, 3
      %p107 = scmp.ne.s32.totalorder %s102, %s104
      %p108 = scmp.eq.s32.totalorder %s14, 0
      %p109 = por %p107, %p108
      %p110 = scmp.ne.s32.totalorder %s102, %s104
      %p111 = scmp.eq.s32.totalorder %s19, 3
      %p112 = por %p110, %p111
      %p113 = scmp.ne.s32.totalorder %s104, %s105
      %p114 = scmp.eq.s32.totalorder %s19, 0
      %p115 = por %p113, %p114
      %p116 = scmp.ne.s32.totalorder %s104, %s105
      %p117 = scmp.eq.s32.totalorder %s20, 3
      %p118 = por %p116, %p117
      %p120 = scmp.ne.s32.totalorder %s105, %s119
      %p121 = scmp.eq.s32.totalorder %s20, 0
      %p122 = por %p120, %p121
      %s124 = sadd.s32 %s123, 1
      %p127 = scmp.eq.s32.totalorder %s14, 3
      %p128 = scmp.ne.s32.totalorder %s123, %s125
      %p129 = scmp.eq.s32.totalorder %s14, 0
      %p130 = por %p128, %p129
      %p131 = scmp.ne.s32.totalorder %s123, %s125
      %p132 = scmp.eq.s32.totalorder %s19, 3
      %p133 = por %p131, %p132
      %p134 = scmp.ne.s32.totalorder %s125, %s126
      %p135 = scmp.eq.s32.totalorder %s19, 0
      %p136 = por %p134, %p135
      %p137 = scmp.ne.s32.totalorder %s125, %s126
      %p138 = scmp.eq.s32.totalorder %s20, 3
      %p139 = por %p137, %p138
      %p141 = scmp.ne.s32.totalorder %s126, %s140
      %p142 = scmp.eq.s32.totalorder %s20, 0
      %p143 = por %p141, %p142
      %s144 = ssub.s32 %s22, %s29
      %p145 = scmp.eq.s32.totalorder %s144, 0
      %s147 = sadd.s32 %s146, 1
      %s148 = scalar_select %p145, %s146, %s147
      %p151 = pneg %p145
      %p152 = scmp.eq.s32.totalorder %s14, 3
      %p153 = por %p151, %p152
      %p154 = scmp.ne.s32.totalorder %s146, %s149
      %p155 = scmp.eq.s32.totalorder %s14, 0
      %p156 = por %p154, %p155
      %p157 = scmp.ne.s32.totalorder %s146, %s149
      %p158 = scmp.eq.s32.totalorder %s19, 3
      %p159 = por %p157, %p158
      %p160 = scmp.ne.s32.totalorder %s149, %s150
      %p161 = scmp.eq.s32.totalorder %s19, 0
      %p162 = por %p160, %p161
      %p163 = scmp.ne.s32.totalorder %s149, %s150
      %p164 = scmp.eq.s32.totalorder %s20, 3
      %p165 = por %p163, %p164
      %p167 = scmp.ne.s32.totalorder %s150, %s166
      %p168 = scmp.eq.s32.totalorder %s20, 0
      %p169 = por %p167, %p168
      %p170 = scmp.le.s32.totalorder 1, %s14
      %p171 = scmp.lt.s32.totalorder %s14, 5
      %p172 = pnand %p170, %p171
      %p173 = pneg %p172
      // Predicated region
      $region9: #{tpu_custom_call.1} parent=5 // pred_check
        _
      $region10: #{tpu_custom_call.1} parent=5 // pred_check_branch
        %175 = sbr.rel (%p172) target = $region12
      $region11: #{tpu_custom_call.1} parent=5 // pred_region
        %s176 = ssub.s32 %s14, 1
        // Predicated region
        $region13: #{tpu_custom_call.1} parent=11 // pred_check
          %p177 = pneg %p73
        $region14: #{tpu_custom_call.1} parent=11 // pred_check_branch
          %179 = sbr.rel (%p177) target = $region16
        $region15: #{tpu_custom_call.1} parent=11 // pred_region
          _
        $region16: #{tpu_custom_call.1} parent=11 // pred_fallthru
          _
        // Predicated region
        $region17: #{tpu_custom_call.1} parent=11 // pred_check
          %p180 = pneg %p94
        $region18: #{tpu_custom_call.1} parent=11 // pred_check_branch
          %182 = sbr.rel (%p180) target = $region20
        $region19: #{tpu_custom_call.1} parent=11 // pred_region
          _
        $region20: #{tpu_custom_call.1} parent=11 // pred_fallthru
          _
        // Predicated region
        $region21: #{tpu_custom_call.1} parent=11 // pred_check
          %p183 = pneg %p115
        $region22: #{tpu_custom_call.1} parent=11 // pred_check_branch
          %185 = sbr.rel (%p183) target = $region24
        $region23: #{tpu_custom_call.1} parent=11 // pred_region
          _
        $region24: #{tpu_custom_call.1} parent=11 // pred_fallthru
          _
        // Predicated region
        $region25: #{tpu_custom_call.1} parent=11 // pred_check
          %p186 = pneg %p136
        $region26: #{tpu_custom_call.1} parent=11 // pred_check_branch
          %188 = sbr.rel (%p186) target = $region28
        $region27: #{tpu_custom_call.1} parent=11 // pred_region
          _
        $region28: #{tpu_custom_call.1} parent=11 // pred_fallthru
          _
      $region12: #{tpu_custom_call.1} parent=5 // pred_fallthru
        _
      %p189 = scmp.lt.s32.totalorder %s14, 4
      // Predicated region
      $region29: #{tpu_custom_call.1} parent=5 // pred_check
        %p190 = pneg %p189
      $region30: #{tpu_custom_call.1} parent=5 // pred_check_branch
        %192 = sbr.rel (%p190) target = $region32
      $region31: #{tpu_custom_call.1} parent=5 // pred_region
        // Predicated region
        $region33: #{tpu_custom_call.1} parent=31 // pred_check
          %p193 = pneg %p46
        $region34: #{tpu_custom_call.1} parent=31 // pred_check_branch
          %195 = sbr.rel (%p193) target = $region36
        $region35: #{tpu_custom_call.1} parent=31 // pred_region
          %p196 = scmp.lt.s32.totalorder %s22, 1
          %s197 = scalar_select %p196, %s22, 1
          %s198 = smul.addr %s197, 4
          %s199 = smul.addr %s198, 2
          %s200 = scalar_lea.vmem %s0, %s199
        $region36: #{tpu_custom_call.1} parent=31 // pred_fallthru
          _
      $region32: #{tpu_custom_call.1} parent=5 // pred_fallthru
        _
      %p201 = scmp.le.s32.totalorder 1, %s14
      %p202 = scmp.lt.s32.totalorder %s14, 5
      %p203 = pnand %p201, %p202
      %p204 = pneg %p203
      // Predicated region
      $region37: #{tpu_custom_call.1} parent=5 // pred_check
        _
      $region38: #{tpu_custom_call.1} parent=5 // pred_check_branch
        %206 = sbr.rel (%p203) target = $region40
      $region39: #{tpu_custom_call.1} parent=5 // pred_region
        %s207 = ssub.s32 %s14, 1
        %p208 = scmp.lt.s32.totalorder %s24, 1
        %s209 = scalar_select %p208, %s24, 1
        %s210 = smul.addr %s209, 4
        %s211 = smul.addr %s210, 2
        %s212 = scalar_lea.vmem %s0, %s211
        %p213 = pneg %p52
        %p214 = pneg %p49
        %p215 = pneg %p73
        %p216 = pneg %p70
        %p217 = pneg %p94
        %p218 = pneg %p91
        %p219 = pneg %p115
        %p220 = pneg %p112
        %p221 = pneg %p136
        %p222 = pneg %p133
        %p223 = pneg %p162
        %p224 = pneg %p159
        %s225 = sand.u32 %s149, 1
        %s226 = scalar_lea.sflag [#allocation5], %s225
        %s227 = sand.u32 %s149, 1
        %s228 = smul.addr %s227, 24
        %s229 = scalar_lea.vmem [#allocation4], %s228
        %p230 = scmp.lt.s32.totalorder %s24, 1
        %s231 = scalar_select %p230, %s24, 1
        %s232 = smul.addr %s231, 4
        %s233 = smul.addr %s232, 2
        %s234 = scalar_lea.vmem %s0, %s233
        %p236 = scmp.eq.s32.totalorder %s23, 0
        %p237 = scmp.eq.s32.totalorder %s24, 0
        %p238 = pnand %p236, %p237
        %p239 = pneg %p238
        // Predicated region
        $region41: #{tpu_custom_call.1} parent=39 // pred_check
          _
        $region42: #{tpu_custom_call.1} parent=39 // pred_check_branch
          %241 = sbr.rel (%p238) target = $region44
        $region43: #{tpu_custom_call.1} parent=39 // pred_region
          %vm242 = vcmask 7168
          %243 = vst.msk [vmem:[#allocation2] sm:$0xff] %vm242, 0.0
          %244 = vst.msk [vmem:[#allocation3] sm:$0xff] %vm242, 0.0
        $region44: #{tpu_custom_call.1} parent=39 // pred_fallthru
          _
        %v245 = vld [vmem:[%s1] sm:$0xf]
        %v246 = vld [vmem:[%s234] sm:$0x3f]
        %s247 = scalar_lea.vmem %s1, 4
        %v248 = vld [vmem:[%s247] sm:$0xf]
        %v249 = vld [vmem:[%s234] sm:$0xff]
        %251 = vst [vmem:[#allocation1] ss:$4 sm:$0xff] %v249
        %v252 = vld.sshfl [vmem:[#allocation1] sm:$0xff pattern:$0x73625140]
        %v254 = vld.sshfl [vmem:[#allocation1 + $0x8] sm:$0xff pattern:$0x73625140]
        %v256 = vld.sshfl [vmem:[#allocation1 + $0x10] sm:$0xff pattern:$0x73625140]
        %v258 = vld.sshfl [vmem:[#allocation1 + $0x18] sm:$0xff pattern:$0x73625140]
        %260 = vrot.lane.b32.xlu0 %v252, 127
        %v261 = vpop.permute.xlu0 %260
        %262 = vrot.lane.b32.xlu0 %v254, 127
        %v263 = vpop.permute.xlu0 %262
        %264 = vrot.lane.b32.xlu0 %v256, 127
        %v265 = vpop.permute.xlu0 %264
        %266 = vrot.lane.b32.xlu0 %v258, 127
        %v267 = vpop.permute.xlu0 %266
        %vm268 = vcmask 1039360
        %v269 = vsel %vm268, %v261, %v263
        %v270 = vsel %vm268, %v263, %v265
        %v271 = vsel %vm268, %v265, %v267
        %vm272 = vcmask 31744
        %v274 = vsel %vm272, %v248, 0
        %vm276 = vcmask 1041408
        %v278 = vsel %vm276, %v269, 0
        %v281 = vsel %vm276, %v270, 0
        %v284 = vsel %vm276, %v271, 0
        %286 = vmatpush.bf16.msra.mxu0 0
        %287 = vmatpush.bf16.msra.mxu0 0
        %288 = vmatpush.bf16.msra.mxu0 0
        %289 = vmatpush.bf16.msra.mxu0 0
        %290 = vmatpush.bf16.msra.mxu0 0
        %291 = vmatpush.bf16.msra.mxu0 0
        %292 = vmatpush.bf16.msra.mxu0 0
        %293 = vmatpush.bf16.msra.mxu0 %v278
        %294 = vmatmul.bf16.gmra.mxu0 %v274
        %v295 = vpop.f32.mrf.mxu0
        %v296 = vadd.f32 0.0, %v295
        %v297 = vpop.f32.mrf.mxu0
        %298 = vdwg.mxu0
        %299 = vmatpush.bf16.msra.mxu0 0
        %300 = vmatpush.bf16.msra.mxu0 0
        %301 = vmatpush.bf16.msra.mxu0 0
        %302 = vmatpush.bf16.msra.mxu0 0
        %303 = vmatpush.bf16.msra.mxu0 0
        %304 = vmatpush.bf16.msra.mxu0 0
        %305 = vmatpush.bf16.msra.mxu0 0
        %306 = vmatpush.bf16.msra.mxu0 %v281
        %307 = vmatmul.bf16.gmra.mxu0 %v274
        %v308 = vpop.f32.mrf.mxu0
        %v309 = vadd.f32 0.0, %v308
        %v310 = vpop.f32.mrf.mxu0
        %311 = vdwg.mxu0
        %312 = vmatpush.bf16.msra.mxu0 0
        %313 = vmatpush.bf16.msra.mxu0 0
        %314 = vmatpush.bf16.msra.mxu0 0
        %315 = vmatpush.bf16.msra.mxu0 0
        %316 = vmatpush.bf16.msra.mxu0 0
        %317 = vmatpush.bf16.msra.mxu0 0
        %318 = vmatpush.bf16.msra.mxu0 0
        %319 = vmatpush.bf16.msra.mxu0 %v284
        %320 = vmatmul.bf16.gmra.mxu0 %v274
        %v321 = vpop.f32.mrf.mxu0
        %v322 = vadd.f32 0.0, %v321
        %v323 = vpop.f32.mrf.mxu0
        %324 = vdwg.mxu0
        %326 = vst [vmem:[#allocation1] ss:$4 sm:$0xff] %v246
        %v327 = vld.sshfl [vmem:[#allocation1] sm:$0xff pattern:$0x73625140]
        %v328 = vld.sshfl [vmem:[#allocation1 + $0x8] sm:$0xff pattern:$0x73625140]
        %v329 = vld.sshfl [vmem:[#allocation1 + $0x10] sm:$0xff pattern:$0x73625140]
        %v331 = vsel %vm272, %v245, 0
        %v333 = vsel %vm276, %v327, 0
        %v335 = vsel %vm276, %v328, 0
        %v337 = vsel %vm276, %v329, 0
        %339 = vmatpush.bf16.msra.mxu0 0
        %340 = vmatpush.bf16.msra.mxu0 0
        %341 = vmatpush.bf16.msra.mxu0 0
        %342 = vmatpush.bf16.msra.mxu0 0
        %343 = vmatpush.bf16.msra.mxu0 0
        %344 = vmatpush.bf16.msra.mxu0 0
        %345 = vmatpush.bf16.msra.mxu0 0
        %346 = vmatpush.bf16.msra.mxu0 %v333
        %347 = vmatmul.bf16.gmra.mxu0 %v331
        %v348 = vpop.f32.mrf.mxu0
        %v349 = vadd.f32 %v296, %v348
        %v350 = vpop.f32.mrf.mxu0
        %351 = vdwg.mxu0
        %352 = vmatpush.bf16.msra.mxu0 0
        %353 = vmatpush.bf16.msra.mxu0 0
        %354 = vmatpush.bf16.msra.mxu0 0
        %355 = vmatpush.bf16.msra.mxu0 0
        %356 = vmatpush.bf16.msra.mxu0 0
        %357 = vmatpush.bf16.msra.mxu0 0
        %358 = vmatpush.bf16.msra.mxu0 0
        %359 = vmatpush.bf16.msra.mxu0 %v335
        %360 = vmatmul.bf16.gmra.mxu0 %v331
        %v361 = vpop.f32.mrf.mxu0
        %v362 = vadd.f32 %v309, %v361
        %v363 = vpop.f32.mrf.mxu0
        %364 = vdwg.mxu0
        %365 = vmatpush.bf16.msra.mxu0 0
        %366 = vmatpush.bf16.msra.mxu0 0
        %367 = vmatpush.bf16.msra.mxu0 0
        %368 = vmatpush.bf16.msra.mxu0 0
        %369 = vmatpush.bf16.msra.mxu0 0
        %370 = vmatpush.bf16.msra.mxu0 0
        %371 = vmatpush.bf16.msra.mxu0 0
        %372 = vmatpush.bf16.msra.mxu0 %v337
        %373 = vmatmul.bf16.gmra.mxu0 %v331
        %v374 = vpop.f32.mrf.mxu0
        %v375 = vadd.f32 %v322, %v374
        %v376 = vpop.f32.mrf.mxu0
        %377 = vdwg.mxu0
        %s378 = scalar_lea.vmem %s1, 8
        %v379 = vld [vmem:[%s378] sm:$0xf]
        %v380 = vld [vmem:[%s234] sm:$0xff]
        %382 = vst [vmem:[#allocation1] ss:$4 sm:$0xff] %v380
        %v383 = vld.sshfl [vmem:[#allocation1] sm:$0xff pattern:$0x73625140]
        %v385 = vld.sshfl [vmem:[#allocation1 + $0x8] sm:$0xff pattern:$0x73625140]
        %v387 = vld.sshfl [vmem:[#allocation1 + $0x10] sm:$0xff pattern:$0x73625140]
        %v389 = vld.sshfl [vmem:[#allocation1 + $0x18] sm:$0xff pattern:$0x73625140]
        %391 = vrot.lane.b32.xlu0 %v383, 126
        %v392 = vpop.permute.xlu0 %391
        %393 = vrot.lane.b32.xlu0 %v385, 126
        %v394 = vpop.permute.xlu0 %393
        %395 = vrot.lane.b32.xlu0 %v387, 126
        %v396 = vpop.permute.xlu0 %395
        %397 = vrot.lane.b32.xlu0 %v389, 126
        %v398 = vpop.permute.xlu0 %397
        %vm399 = vcmask 1031168
        %v400 = vsel %vm399, %v392, %v394
        %v401 = vsel %vm399, %v394, %v396
        %v402 = vsel %vm399, %v396, %v398
        %v404 = vsel %vm272, %v379, 0
        %v407 = vsel %vm276, %v400, 0
        %v410 = vsel %vm276, %v401, 0
        %v413 = vsel %vm276, %v402, 0
        %415 = vmatpush.bf16.msra.mxu0 0
        %416 = vmatpush.bf16.msra.mxu0 0
        %417 = vmatpush.bf16.msra.mxu0 0
        %418 = vmatpush.bf16.msra.mxu0 0
        %419 = vmatpush.bf16.msra.mxu0 0
        %420 = vmatpush.bf16.msra.mxu0 0
        %421 = vmatpush.bf16.msra.mxu0 0
        %422 = vmatpush.bf16.msra.mxu0 %v407
        %423 = vmatmul.bf16.gmra.mxu0 %v404
        %v424 = vpop.f32.mrf.mxu0
        %v425 = vadd.f32 0.0, %v424
        %v426 = vpop.f32.mrf.mxu0
        %427 = vdwg.mxu0
        %428 = vmatpush.bf16.msra.mxu0 0
        %429 = vmatpush.bf16.msra.mxu0 0
        %430 = vmatpush.bf16.msra.mxu0 0
        %431 = vmatpush.bf16.msra.mxu0 0
        %432 = vmatpush.bf16.msra.mxu0 0
        %433 = vmatpush.bf16.msra.mxu0 0
        %434 = vmatpush.bf16.msra.mxu0 0
        %435 = vmatpush.bf16.msra.mxu0 %v410
        %436 = vmatmul.bf16.gmra.mxu0 %v404
        %v437 = vpop.f32.mrf.mxu0
        %v438 = vadd.f32 0.0, %v437
        %v439 = vpop.f32.mrf.mxu0
        %440 = vdwg.mxu0
        %441 = vmatpush.bf16.msra.mxu0 0
        %442 = vmatpush.bf16.msra.mxu0 0
        %443 = vmatpush.bf16.msra.mxu0 0
        %444 = vmatpush.bf16.msra.mxu0 0
        %445 = vmatpush.bf16.msra.mxu0 0
        %446 = vmatpush.bf16.msra.mxu0 0
        %447 = vmatpush.bf16.msra.mxu0 0
        %448 = vmatpush.bf16.msra.mxu0 %v413
        %449 = vmatmul.bf16.gmra.mxu0 %v404
        %v450 = vpop.f32.mrf.mxu0
        %v451 = vadd.f32 0.0, %v450
        %v452 = vpop.f32.mrf.mxu0
        %453 = vdwg.mxu0
        %v454 = vadd.f32 %v349, %v425
        %v455 = vadd.f32 %v362, %v438
        %v456 = vadd.f32 %v375, %v451
        %s457 = scalar_lea.vmem %s1, 12
        %v458 = vld [vmem:[%s457] sm:$0xf]
        %v459 = vld [vmem:[%s234] sm:$0xff]
        %461 = vst [vmem:[#allocation1] ss:$4 sm:$0xff] %v459
        %v462 = vld.sshfl [vmem:[#allocation1] sm:$0xff pattern:$0x73625140]
        %v464 = vld.sshfl [vmem:[#allocation1 + $0x8] sm:$0xff pattern:$0x73625140]
        %v466 = vld.sshfl [vmem:[#allocation1 + $0x10] sm:$0xff pattern:$0x73625140]
        %v468 = vld.sshfl [vmem:[#allocation1 + $0x18] sm:$0xff pattern:$0x73625140]
        %470 = vrot.lane.b32.xlu0 %v462, 110
        %v471 = vpop.permute.xlu0 %470
        %472 = vrot.lane.b32.xlu0 %v464, 110
        %v473 = vpop.permute.xlu0 %472
        %474 = vrot.lane.b32.xlu0 %v466, 110
        %v475 = vpop.permute.xlu0 %474
        %476 = vrot.lane.b32.xlu0 %v468, 110
        %v477 = vpop.permute.xlu0 %476
        %vm478 = vcmask 900096
        %v479 = vsel %vm478, %v471, %v473
        %v480 = vsel %vm478, %v473, %v475
        %v481 = vsel %vm478, %v475, %v477
        %v483 = vsel %vm272, %v458, 0
        %v486 = vsel %vm276, %v479, 0
        %v489 = vsel %vm276, %v480, 0
        %v492 = vsel %vm276, %v481, 0
        %494 = vmatpush.bf16.msra.mxu0 0
        %495 = vmatpush.bf16.msra.mxu0 0
        %496 = vmatpush.bf16.msra.mxu0 0
        %497 = vmatpush.bf16.msra.mxu0 0
        %498 = vmatpush.bf16.msra.mxu0 0
        %499 = vmatpush.bf16.msra.mxu0 0
        %500 = vmatpush.bf16.msra.mxu0 0
        %501 = vmatpush.bf16.msra.mxu0 %v486
        %502 = vmatmul.bf16.gmra.mxu0 %v483
        %v503 = vpop.f32.mrf.mxu0
        %v504 = vadd.f32 0.0, %v503
        %v505 = vpop.f32.mrf.mxu0
        %506 = vdwg.mxu0
        %507 = vmatpush.bf16.msra.mxu0 0
        %508 = vmatpush.bf16.msra.mxu0 0
        %509 = vmatpush.bf16.msra.mxu0 0
        %510 = vmatpush.bf16.msra.mxu0 0
        %511 = vmatpush.bf16.msra.mxu0 0
        %512 = vmatpush.bf16.msra.mxu0 0
        %513 = vmatpush.bf16.msra.mxu0 0
        %514 = vmatpush.bf16.msra.mxu0 %v489
        %515 = vmatmul.bf16.gmra.mxu0 %v483
        %v516 = vpop.f32.mrf.mxu0
        %v517 = vadd.f32 0.0, %v516
        %v518 = vpop.f32.mrf.mxu0
        %519 = vdwg.mxu0
        %520 = vmatpush.bf16.msra.mxu0 0
        %521 = vmatpush.bf16.msra.mxu0 0
        %522 = vmatpush.bf16.msra.mxu0 0
        %523 = vmatpush.bf16.msra.mxu0 0
        %524 = vmatpush.bf16.msra.mxu0 0
        %525 = vmatpush.bf16.msra.mxu0 0
        %526 = vmatpush.bf16.msra.mxu0 0
        %527 = vmatpush.bf16.msra.mxu0 %v492
        %528 = vmatmul.bf16.gmra.mxu0 %v483
        %v529 = vpop.f32.mrf.mxu0
        %v530 = vadd.f32 0.0, %v529
        %v531 = vpop.f32.mrf.mxu0
        %532 = vdwg.mxu0
        %v533 = vadd.f32 %v454, %v504
        %v534 = vadd.f32 %v455, %v517
        %v535 = vadd.f32 %v456, %v530
        %s536 = scalar_lea.vmem %s1, 16
        %v537 = vld [vmem:[%s536] sm:$0xf]
        %v538 = vld [vmem:[%s234] sm:$0xff]
        %540 = vst [vmem:[#allocation1] ss:$4 sm:$0xff] %v538
        %v541 = vld.sshfl [vmem:[#allocation1] sm:$0xff pattern:$0x73625140]
        %v543 = vld.sshfl [vmem:[#allocation1 + $0x8] sm:$0xff pattern:$0x73625140]
        %v545 = vld.sshfl [vmem:[#allocation1 + $0x10] sm:$0xff pattern:$0x73625140]
        %v547 = vld.sshfl [vmem:[#allocation1 + $0x18] sm:$0xff pattern:$0x73625140]
        %549 = vrot.lane.b32.xlu0 %v541, 109
        %v550 = vpop.permute.xlu0 %549
        %551 = vrot.lane.b32.xlu0 %v543, 109
        %v552 = vpop.permute.xlu0 %551
        %553 = vrot.lane.b32.xlu0 %v545, 109
        %v554 = vpop.permute.xlu0 %553
        %555 = vrot.lane.b32.xlu0 %v547, 109
        %v556 = vpop.permute.xlu0 %555
        %vm557 = vcmask 891904
        %v558 = vsel %vm557, %v550, %v552
        %v559 = vsel %vm557, %v552, %v554
        %v560 = vsel %vm557, %v554, %v556
        %v562 = vsel %vm272, %v537, 0
        %v565 = vsel %vm276, %v558, 0
        %v568 = vsel %vm276, %v559, 0
        %v571 = vsel %vm276, %v560, 0
        %573 = vmatpush.bf16.msra.mxu0 0
        %574 = vmatpush.bf16.msra.mxu0 0
        %575 = vmatpush.bf16.msra.mxu0 0
        %576 = vmatpush.bf16.msra.mxu0 0
        %577 = vmatpush.bf16.msra.mxu0 0
        %578 = vmatpush.bf16.msra.mxu0 0
        %579 = vmatpush.bf16.msra.mxu0 0
        %580 = vmatpush.bf16.msra.mxu0 %v565
        %581 = vmatmul.bf16.gmra.mxu0 %v562
        %v582 = vpop.f32.mrf.mxu0
        %v583 = vadd.f32 0.0, %v582
        %v584 = vpop.f32.mrf.mxu0
        %585 = vdwg.mxu0
        %586 = vmatpush.bf16.msra.mxu0 0
        %587 = vmatpush.bf16.msra.mxu0 0
        %588 = vmatpush.bf16.msra.mxu0 0
        %589 = vmatpush.bf16.msra.mxu0 0
        %590 = vmatpush.bf16.msra.mxu0 0
        %591 = vmatpush.bf16.msra.mxu0 0
        %592 = vmatpush.bf16.msra.mxu0 0
        %593 = vmatpush.bf16.msra.mxu0 %v568
        %594 = vmatmul.bf16.gmra.mxu0 %v562
        %v595 = vpop.f32.mrf.mxu0
        %v596 = vadd.f32 0.0, %v595
        %v597 = vpop.f32.mrf.mxu0
        %598 = vdwg.mxu0
        %599 = vmatpush.bf16.msra.mxu0 0
        %600 = vmatpush.bf16.msra.mxu0 0
        %601 = vmatpush.bf16.msra.mxu0 0
        %602 = vmatpush.bf16.msra.mxu0 0
        %603 = vmatpush.bf16.msra.mxu0 0
        %604 = vmatpush.bf16.msra.mxu0 0
        %605 = vmatpush.bf16.msra.mxu0 0
        %606 = vmatpush.bf16.msra.mxu0 %v571
        %607 = vmatmul.bf16.gmra.mxu0 %v562
        %v608 = vpop.f32.mrf.mxu0
        %v609 = vadd.f32 0.0, %v608
        %v610 = vpop.f32.mrf.mxu0
        %611 = vdwg.mxu0
        %v612 = vadd.f32 %v533, %v583
        %v613 = vadd.f32 %v534, %v596
        %v614 = vadd.f32 %v535, %v609
        %s615 = scalar_lea.vmem %s1, 20
        %v616 = vld [vmem:[%s615] sm:$0xf]
        %v617 = vld [vmem:[%s234] sm:$0xff]
        %619 = vst [vmem:[#allocation1] ss:$4 sm:$0xff] %v617
        %v620 = vld.sshfl [vmem:[#allocation1] sm:$0xff pattern:$0x73625140]
        %v622 = vld.sshfl [vmem:[#allocation1 + $0x8] sm:$0xff pattern:$0x73625140]
        %v624 = vld.sshfl [vmem:[#allocation1 + $0x10] sm:$0xff pattern:$0x73625140]
        %v626 = vld.sshfl [vmem:[#allocation1 + $0x18] sm:$0xff pattern:$0x73625140]
        %628 = vrot.lane.b32.xlu0 %v620, 108
        %v629 = vpop.permute.xlu0 %628
        %630 = vrot.lane.b32.xlu0 %v622, 108
        %v631 = vpop.permute.xlu0 %630
        %632 = vrot.lane.b32.xlu0 %v624, 108
        %v633 = vpop.permute.xlu0 %632
        %634 = vrot.lane.b32.xlu0 %v626, 108
        %v635 = vpop.permute.xlu0 %634
        %vm636 = vcmask 883712
        %v637 = vsel %vm636, %v629, %v631
        %v638 = vsel %vm636, %v631, %v633
        %v639 = vsel %vm636, %v633, %v635
        %v641 = vsel %vm272, %v616, 0
        %v644 = vsel %vm276, %v637, 0
        %v647 = vsel %vm276, %v638, 0
        %v650 = vsel %vm276, %v639, 0
        %652 = vmatpush.bf16.msra.mxu0 0
        %653 = vmatpush.bf16.msra.mxu0 0
        %654 = vmatpush.bf16.msra.mxu0 0
        %655 = vmatpush.bf16.msra.mxu0 0
        %656 = vmatpush.bf16.msra.mxu0 0
        %657 = vmatpush.bf16.msra.mxu0 0
        %658 = vmatpush.bf16.msra.mxu0 0
        %659 = vmatpush.bf16.msra.mxu0 %v644
        %660 = vmatmul.bf16.gmra.mxu0 %v641
        %v661 = vpop.f32.mrf.mxu0
        %v662 = vadd.f32 0.0, %v661
        %v663 = vpop.f32.mrf.mxu0
        %664 = vdwg.mxu0
        %665 = vmatpush.bf16.msra.mxu0 0
        %666 = vmatpush.bf16.msra.mxu0 0
        %667 = vmatpush.bf16.msra.mxu0 0
        %668 = vmatpush.bf16.msra.mxu0 0
        %669 = vmatpush.bf16.msra.mxu0 0
        %670 = vmatpush.bf16.msra.mxu0 0
        %671 = vmatpush.bf16.msra.mxu0 0
        %672 = vmatpush.bf16.msra.mxu0 %v647
        %673 = vmatmul.bf16.gmra.mxu0 %v641
        %v674 = vpop.f32.mrf.mxu0
        %v675 = vadd.f32 0.0, %v674
        %v676 = vpop.f32.mrf.mxu0
        %677 = vdwg.mxu0
        %678 = vmatpush.bf16.msra.mxu0 0
        %679 = vmatpush.bf16.msra.mxu0 0
        %680 = vmatpush.bf16.msra.mxu0 0
        %681 = vmatpush.bf16.msra.mxu0 0
        %682 = vmatpush.bf16.msra.mxu0 0
        %683 = vmatpush.bf16.msra.mxu0 0
        %684 = vmatpush.bf16.msra.mxu0 0
        %685 = vmatpush.bf16.msra.mxu0 %v650
        %686 = vmatmul.bf16.gmra.mxu0 %v641
        %v687 = vpop.f32.mrf.mxu0
        %v688 = vadd.f32 0.0, %v687
        %v689 = vpop.f32.mrf.mxu0
        %690 = vdwg.mxu0
        %v691 = vadd.f32 %v612, %v662
        %v692 = vadd.f32 %v613, %v675
        %v693 = vadd.f32 %v614, %v688
        %s694 = scalar_lea.vmem %s1, 24
        %v695 = vld [vmem:[%s694] sm:$0xf]
        %v696 = vld [vmem:[%s234] sm:$0xff]
        %698 = vst [vmem:[#allocation1] ss:$4 sm:$0xff] %v696
        %v699 = vld.sshfl [vmem:[#allocation1] sm:$0xff pattern:$0x73625140]
        %v701 = vld.sshfl [vmem:[#allocation1 + $0x8] sm:$0xff pattern:$0x73625140]
        %v703 = vld.sshfl [vmem:[#allocation1 + $0x10] sm:$0xff pattern:$0x73625140]
        %v705 = vld.sshfl [vmem:[#allocation1 + $0x18] sm:$0xff pattern:$0x73625140]
        %707 = vrot.lane.b32.xlu0 %v699, 92
        %v708 = vpop.permute.xlu0 %707
        %709 = vrot.lane.b32.xlu0 %v701, 92
        %v710 = vpop.permute.xlu0 %709
        %711 = vrot.lane.b32.xlu0 %v703, 92
        %v712 = vpop.permute.xlu0 %711
        %713 = vrot.lane.b32.xlu0 %v705, 92
        %v714 = vpop.permute.xlu0 %713
        %vm715 = vcmask 752640
        %v716 = vsel %vm715, %v708, %v710
        %v717 = vsel %vm715, %v710, %v712
        %v718 = vsel %vm715, %v712, %v714
        %v720 = vsel %vm272, %v695, 0
        %v723 = vsel %vm276, %v716, 0
        %v726 = vsel %vm276, %v717, 0
        %v729 = vsel %vm276, %v718, 0
        %731 = vmatpush.bf16.msra.mxu0 0
        %732 = vmatpush.bf16.msra.mxu0 0
        %733 = vmatpush.bf16.msra.mxu0 0
        %734 = vmatpush.bf16.msra.mxu0 0
        %735 = vmatpush.bf16.msra.mxu0 0
        %736 = vmatpush.bf16.msra.mxu0 0
        %737 = vmatpush.bf16.msra.mxu0 0
        %738 = vmatpush.bf16.msra.mxu0 %v723
        %739 = vmatmul.bf16.gmra.mxu0 %v720
        %v740 = vpop.f32.mrf.mxu0
        %v741 = vadd.f32 0.0, %v740
        %v742 = vpop.f32.mrf.mxu0
        %743 = vdwg.mxu0
        %744 = vmatpush.bf16.msra.mxu0 0
        %745 = vmatpush.bf16.msra.mxu0 0
        %746 = vmatpush.bf16.msra.mxu0 0
        %747 = vmatpush.bf16.msra.mxu0 0
        %748 = vmatpush.bf16.msra.mxu0 0
        %749 = vmatpush.bf16.msra.mxu0 0
        %750 = vmatpush.bf16.msra.mxu0 0
        %751 = vmatpush.bf16.msra.mxu0 %v726
        %752 = vmatmul.bf16.gmra.mxu0 %v720
        %v753 = vpop.f32.mrf.mxu0
        %v754 = vadd.f32 0.0, %v753
        %v755 = vpop.f32.mrf.mxu0
        %756 = vdwg.mxu0
        %757 = vmatpush.bf16.msra.mxu0 0
        %758 = vmatpush.bf16.msra.mxu0 0
        %759 = vmatpush.bf16.msra.mxu0 0
        %760 = vmatpush.bf16.msra.mxu0 0
        %761 = vmatpush.bf16.msra.mxu0 0
        %762 = vmatpush.bf16.msra.mxu0 0
        %763 = vmatpush.bf16.msra.mxu0 0
        %764 = vmatpush.bf16.msra.mxu0 %v729
        %765 = vmatmul.bf16.gmra.mxu0 %v720
        %v766 = vpop.f32.mrf.mxu0
        %v767 = vadd.f32 0.0, %v766
        %v768 = vpop.f32.mrf.mxu0
        %769 = vdwg.mxu0
        %v770 = vadd.f32 %v691, %v741
        %v771 = vadd.f32 %v692, %v754
        %v772 = vadd.f32 %v693, %v767
        %s773 = scalar_lea.vmem %s1, 28
        %v774 = vld [vmem:[%s773] sm:$0xf]
        %v775 = vld [vmem:[%s234] sm:$0xff]
        %777 = vst [vmem:[#allocation1] ss:$4 sm:$0xff] %v775
        %v778 = vld.sshfl [vmem:[#allocation1] sm:$0xff pattern:$0x73625140]
        %v780 = vld.sshfl [vmem:[#allocation1 + $0x8] sm:$0xff pattern:$0x73625140]
        %v782 = vld.sshfl [vmem:[#allocation1 + $0x10] sm:$0xff pattern:$0x73625140]
        %v784 = vld.sshfl [vmem:[#allocation1 + $0x18] sm:$0xff pattern:$0x73625140]
        %786 = vrot.lane.b32.xlu0 %v778, 91
        %v787 = vpop.permute.xlu0 %786
        %788 = vrot.lane.b32.xlu0 %v780, 91
        %v789 = vpop.permute.xlu0 %788
        %790 = vrot.lane.b32.xlu0 %v782, 91
        %v791 = vpop.permute.xlu0 %790
        %792 = vrot.lane.b32.xlu0 %v784, 91
        %v793 = vpop.permute.xlu0 %792
        %vm794 = vcmask 744448
        %v795 = vsel %vm794, %v787, %v789
        %v796 = vsel %vm794, %v789, %v791
        %v797 = vsel %vm794, %v791, %v793
        %v799 = vsel %vm272, %v774, 0
        %v802 = vsel %vm276, %v795, 0
        %v805 = vsel %vm276, %v796, 0
        %v808 = vsel %vm276, %v797, 0
        %810 = vmatpush.bf16.msra.mxu0 0
        %811 = vmatpush.bf16.msra.mxu0 0
        %812 = vmatpush.bf16.msra.mxu0 0
        %813 = vmatpush.bf16.msra.mxu0 0
        %814 = vmatpush.bf16.msra.mxu0 0
        %815 = vmatpush.bf16.msra.mxu0 0
        %816 = vmatpush.bf16.msra.mxu0 0
        %817 = vmatpush.bf16.msra.mxu0 %v802
        %818 = vmatmul.bf16.gmra.mxu0 %v799
        %v819 = vpop.f32.mrf.mxu0
        %v820 = vadd.f32 0.0, %v819
        %v821 = vpop.f32.mrf.mxu0
        %822 = vdwg.mxu0
        %823 = vmatpush.bf16.msra.mxu0 0
        %824 = vmatpush.bf16.msra.mxu0 0
        %825 = vmatpush.bf16.msra.mxu0 0
        %826 = vmatpush.bf16.msra.mxu0 0
        %827 = vmatpush.bf16.msra.mxu0 0
        %828 = vmatpush.bf16.msra.mxu0 0
        %829 = vmatpush.bf16.msra.mxu0 0
        %830 = vmatpush.bf16.msra.mxu0 %v805
        %831 = vmatmul.bf16.gmra.mxu0 %v799
        %v832 = vpop.f32.mrf.mxu0
        %v833 = vadd.f32 0.0, %v832
        %v834 = vpop.f32.mrf.mxu0
        %835 = vdwg.mxu0
        %836 = vmatpush.bf16.msra.mxu0 0
        %837 = vmatpush.bf16.msra.mxu0 0
        %838 = vmatpush.bf16.msra.mxu0 0
        %839 = vmatpush.bf16.msra.mxu0 0
        %840 = vmatpush.bf16.msra.mxu0 0
        %841 = vmatpush.bf16.msra.mxu0 0
        %842 = vmatpush.bf16.msra.mxu0 0
        %843 = vmatpush.bf16.msra.mxu0 %v808
        %844 = vmatmul.bf16.gmra.mxu0 %v799
        %v845 = vpop.f32.mrf.mxu0
        %v846 = vadd.f32 0.0, %v845
        %v847 = vpop.f32.mrf.mxu0
        %848 = vdwg.mxu0
        %v849 = vadd.f32 %v770, %v820
        %v850 = vadd.f32 %v771, %v833
        %v851 = vadd.f32 %v772, %v846
        %s852 = scalar_lea.vmem %s1, 32
        %v853 = vld [vmem:[%s852] sm:$0xf]
        %v854 = vld [vmem:[%s234] sm:$0xff]
        %856 = vst [vmem:[#allocation1] ss:$4 sm:$0xff] %v854
        %v857 = vld.sshfl [vmem:[#allocation1] sm:$0xff pattern:$0x73625140]
        %v859 = vld.sshfl [vmem:[#allocation1 + $0x8] sm:$0xff pattern:$0x73625140]
        %v861 = vld.sshfl [vmem:[#allocation1 + $0x10] sm:$0xff pattern:$0x73625140]
        %v863 = vld.sshfl [vmem:[#allocation1 + $0x18] sm:$0xff pattern:$0x73625140]
        %865 = vrot.lane.b32.xlu0 %v857, 90
        %v866 = vpop.permute.xlu0 %865
        %867 = vrot.lane.b32.xlu0 %v859, 90
        %v868 = vpop.permute.xlu0 %867
        %869 = vrot.lane.b32.xlu0 %v861, 90
        %v870 = vpop.permute.xlu0 %869
        %871 = vrot.lane.b32.xlu0 %v863, 90
        %v872 = vpop.permute.xlu0 %871
        %vm873 = vcmask 736256
        %v874 = vsel %vm873, %v866, %v868
        %v875 = vsel %vm873, %v868, %v870
        %v876 = vsel %vm873, %v870, %v872
        %v878 = vsel %vm272, %v853, 0
        %v881 = vsel %vm276, %v874, 0
        %v884 = vsel %vm276, %v875, 0
        %v887 = vsel %vm276, %v876, 0
        %889 = vmatpush.bf16.msra.mxu0 0
        %890 = vmatpush.bf16.msra.mxu0 0
        %891 = vmatpush.bf16.msra.mxu0 0
        %892 = vmatpush.bf16.msra.mxu0 0
        %893 = vmatpush.bf16.msra.mxu0 0
        %894 = vmatpush.bf16.msra.mxu0 0
        %895 = vmatpush.bf16.msra.mxu0 0
        %896 = vmatpush.bf16.msra.mxu0 %v881
        %897 = vmatmul.bf16.gmra.mxu0 %v878
        %v898 = vpop.f32.mrf.mxu0
        %v899 = vadd.f32 0.0, %v898
        %v900 = vpop.f32.mrf.mxu0
        %901 = vdwg.mxu0
        %902 = vmatpush.bf16.msra.mxu0 0
        %903 = vmatpush.bf16.msra.mxu0 0
        %904 = vmatpush.bf16.msra.mxu0 0
        %905 = vmatpush.bf16.msra.mxu0 0
        %906 = vmatpush.bf16.msra.mxu0 0
        %907 = vmatpush.bf16.msra.mxu0 0
        %908 = vmatpush.bf16.msra.mxu0 0
        %909 = vmatpush.bf16.msra.mxu0 %v884
        %910 = vmatmul.bf16.gmra.mxu0 %v878
        %v911 = vpop.f32.mrf.mxu0
        %v912 = vadd.f32 0.0, %v911
        %v913 = vpop.f32.mrf.mxu0
        %914 = vdwg.mxu0
        %915 = vmatpush.bf16.msra.mxu0 0
        %916 = vmatpush.bf16.msra.mxu0 0
        %917 = vmatpush.bf16.msra.mxu0 0
        %918 = vmatpush.bf16.msra.mxu0 0
        %919 = vmatpush.bf16.msra.mxu0 0
        %920 = vmatpush.bf16.msra.mxu0 0
        %921 = vmatpush.bf16.msra.mxu0 0
        %922 = vmatpush.bf16.msra.mxu0 %v887
        %923 = vmatmul.bf16.gmra.mxu0 %v878
        %v924 = vpop.f32.mrf.mxu0
        %v925 = vadd.f32 0.0, %v924
        %v926 = vpop.f32.mrf.mxu0
        %927 = vdwg.mxu0
        %v928 = vadd.f32 %v849, %v899
        %v929 = vadd.f32 %v850, %v912
        %v930 = vadd.f32 %v851, %v925
        // Predicated region
        $region45: #{tpu_custom_call.1} parent=39 // pred_check
          %p931 = pneg %p236
        $region46: #{tpu_custom_call.1} parent=39 // pred_check_branch
          %933 = sbr.rel (%p931) target = $region48
        $region47: #{tpu_custom_call.1} parent=39 // pred_region
          %v934 = vld [vmem:[%s2] sm:$0x7]
          %v936 = vperm.slane %v934, 0
          %v937 = vperm.slane %v934, 1
          %v938 = vperm.slane %v934, 2
          %v942 = vmul.f32 %v928, %v936
          %v943 = vmul.f32 %v929, %v937
          %v944 = vmul.f32 %v930, %v938
          %v945 = vld [vmem:[#allocation2] sm:$0xff]
          %v946 = vadd.f32 %v942, %v943
          %v947 = vadd.f32 %v946, %v944
          %948 = vadd.xlane.f32.xlu0 %v947
          %v949 = vpop.xlane.xlu0 %948
          %v950 = vadd.f32 %v945, %v949
          %vm951 = vcmask 7168
          %952 = vst.msk [vmem:[#allocation2] sm:$0xff] %vm951, %v950
          %v953 = vld [vmem:[#allocation3] sm:$0xff]
          %v954 = vmul.f32 %v942, %v928
          %v955 = vmul.f32 %v943, %v929
          %v956 = vmul.f32 %v944, %v930
          %v957 = vadd.f32 %v954, %v955
          %v958 = vadd.f32 %v957, %v956
          %959 = vadd.xlane.f32.xlu0 %v958
          %v960 = vpop.xlane.xlu0 %959
          %v961 = vadd.f32 %v953, %v960
          %962 = vst.msk [vmem:[#allocation3] sm:$0xff] %vm951, %v961
        $region48: #{tpu_custom_call.1} parent=39 // pred_fallthru
          _
        %p963 = scmp.eq.s32.totalorder %s23, 1
        // Predicated region
        $region49: #{tpu_custom_call.1} parent=39 // pred_check
          %p964 = pneg %p963
        $region50: #{tpu_custom_call.1} parent=39 // pred_check_branch
          %966 = sbr.rel (%p964) target = $region52
        $region51: #{tpu_custom_call.1} parent=39 // pred_region
          %v967 = vld [vmem:[#allocation2] sm:$0xff]
          %v968 = vmul.f32 %v967, 0.001953125
          %v969 = vld [vmem:[#allocation3] sm:$0xff]
          %v970 = vmul.f32 %v969, 0.001953125
          %v971 = vmul.f32 %v968, %v968
          %v972 = vsub.f32 %v970, %v971
          %v973 = vadd.f32 %v972, 1e-05
          %v974 = vrsqrt.pop %v973
          %v975 = vmul.f32 %v974, %v973
          %v976 = vmul.f32 %v975, %v974
          %v977 = vmul.f32 0.5, %v976
          %v978 = vsub.f32 1.5, %v977
          %v979 = vmul.f32 %v974, %v978
          %vm980 = vweird.f32 %v973
          %vm981 = vweird.f32 %v974
          %vm982 = vmor %vm980, %vm981
          %v983 = vsel %vm982, %v974, %v979
          %v984 = vld [vmem:[%s3] sm:$0xff]
          %v985 = vmul.f32 %v983, %v984
          %v986 = vld [vmem:[%s4] sm:$0xff]
          %v987 = vmul.f32 %v968, %v985
          %v988 = vsub.f32 %v986, %v987
          %990 = vset.pattern.permute.xlu0 0
          %991 = vperm.xlu0 %990, %v985
          %v992 = vpop.permute.xlu0 %991
          %v994 = vmul.f32 %v928, %v992
          %v995 = vmul.f32 %v929, %v992
          %v996 = vmul.f32 %v930, %v992
          %998 = vset.pattern.permute.xlu0 0
          %999 = vperm.xlu0 %998, %v988
          %v1000 = vpop.permute.xlu0 %999
          %v1002 = vadd.f32 %v994, %v1000
          %v1003 = vadd.f32 %v995, %v1000
          %v1004 = vadd.f32 %v996, %v1000
          %v1005 = vmax.f32 %v1002, 0.0
          %v1006 = vmax.f32 %v1003, 0.0
          %v1007 = vmax.f32 %v1004, 0.0
          %1008 = vst [vmem:[%s229] sm:$0xff] %v1005
          %1009 = vst [vmem:[%s229 + $0x8] sm:$0xff] %v1006
          %1010 = vst [vmem:[%s229 + $0x10] sm:$0xff] %v1007
        $region52: #{tpu_custom_call.1} parent=39 // pred_fallthru
          _
        %s1011 = sand.u32 %s149, 1
        %s1012 = scalar_lea.sflag [#allocation5], %s1011
        %s1013 = sand.u32 %s149, 1
        %s1014 = smul.addr %s1013, 24
        %s1015 = scalar_lea.vmem [#allocation4], %s1014
        // Predicated region
        $region53: #{tpu_custom_call.1} parent=39 // pred_check
          %p1016 = pneg %p159
        $region54: #{tpu_custom_call.1} parent=39 // pred_check_branch
          %1018 = sbr.rel (%p1016) target = $region56
        $region55: #{tpu_custom_call.1} parent=39 // pred_region
          %1020 = vsyncadd %s1012, 0
          %s1021 = smul.addr %s24, 3
          %s1022 = smul.addr %s1021, 8
          %s1023 = scalar_lea.hbm %s5, %s1022
          %s1025 = sshll.u32 %s1015, 4
          %s1026 = int_to_ptr.vmem [resolvable:$true] %s1025
          %s1027 = sshll.u32 %s1023, 4
          %s1028 = int_to_ptr.hbm [resolvable:$true] %s1027
          %1030 = dma.vmem_to_hbm [thread:$0]  %s1026, 384, %s1028, %s1012
        $region56: #{tpu_custom_call.1} parent=39 // pred_fallthru
          _
      $region40: #{tpu_custom_call.1} parent=5 // pred_fallthru
        _
      %p1031 = scmp.le.s32.totalorder 2, %s14
      // Predicated region
      $region57: #{tpu_custom_call.1} parent=5 // pred_check
        %p1032 = pneg %p1031
      $region58: #{tpu_custom_call.1} parent=5 // pred_check_branch
        %1034 = sbr.rel (%p1032) target = $region60
      $region59: #{tpu_custom_call.1} parent=5 // pred_region
        %s1035 = ssub.s32 %s14, 2
        // Predicated region
        $region61: #{tpu_custom_call.1} parent=59 // pred_check
          %p1036 = pneg %p165
        $region62: #{tpu_custom_call.1} parent=59 // pred_check_branch
          %1038 = sbr.rel (%p1036) target = $region64
        $region63: #{tpu_custom_call.1} parent=59 // pred_region
          %s1039 = sand.u32 %s150, 1
          %s1040 = scalar_lea.sflag [#allocation5], %s1039
          %s1041 = sand.u32 %s150, 1
          %s1042 = smul.addr %s1041, 24
          %s1043 = scalar_lea.vmem [#allocation4], %s1042
          %1045 = dma.done %s1040, 384
        $region64: #{tpu_custom_call.1} parent=59 // pred_fallthru
          _
      $region60: #{tpu_custom_call.1} parent=5 // pred_fallthru
        _
    $region6: #{tpu_custom_call.1} parent=1 // loop_footer
      %s18 = sadd.s32 1, %s14
    $region7: #{tpu_custom_call.1} parent=1 // loop_footer_branch
      %13 = sbr.rel target = $region3
    $region8: #{tpu_custom_call.1} parent=1 // loop_exit
      _
    %1046 = vsyncpa [#allocation5], 1
    %s1047 = scalar_lea.sflag [#allocation5], 1
    %1048 = vsyncpa %s1047, 1

</llo_original>
